<compile_context>
chip_gen: v5e
topology: v5e:2x2
jax: 0.10.0
libtpu: 0.0.40
codegen_flags: <defaults>
</compile_context>

<pallas_src>
import jax
import jax.numpy as jnp
from jax.experimental import pallas as pl
from jax.experimental.pallas import tpu as pltpu


def _round_up(n, m):
    return ((n + m - 1) // m) * m


def _tpu_limits():
    """Physical per-core VMEM bytes and TensorCores per chip (best effort)."""
    vmem_phys = 128 << 20
    num_cores = 1
    try:
        info = pltpu.get_tpu_info()
        vmem_phys = int(getattr(info, "vmem_capacity_bytes", vmem_phys))
    except Exception:
        pass
    try:
        num_cores = int(getattr(jax.devices()[0], "num_cores", 1) or 1)
    except Exception:
        pass
    # v7x-class parts have 64 MiB VMEM per TC and 2 TCs per chip.
    if vmem_phys <= (64 << 20):
        num_cores = max(num_cores, 2)
    return vmem_phys, num_cores


def bhead_kernel(x_ref, w_sa_ref, b_sa_ref, w_cv_ref, b_cv_ref, o_ref):
    # x_ref:   (Bb, C_in, Tp)  block of batch elements (T, C padded)
    # w_sa:    (C_in, C_in)    SpatialAttention 1x1-conv weight, pre-scaled by 1/T
    # b_sa:    (1, C_in)       SpatialAttention 1x1-conv bias (row layout)
    # w_cv:    (C_out, C_in)   head 1x1-conv weight
    # b_cv:    (C_out, 1)      head 1x1-conv bias
    # o_ref:   (Bb, C_out, Tp)
    x = x_ref[...]                                            # native dtype

    # --- AdaptiveAvgPool1d(1): sum over (zero-padded) time, f32 accumulate.
    #     The 1/T scale is folded into w_sa in the wrapper.
    pooled = jnp.sum(x, axis=-1, dtype=jnp.float32)           # (Bb, C_in)

    # --- SpatialAttention 1x1 conv on the pooled vector (MXU matmul):
    #     att[b, o] = sum_c w_sa[o, c] * (pooled[b, c] / T) + b_sa[o]
    att = jax.lax.dot_general(
        pooled, w_sa_ref[...].astype(jnp.float32),
        dimension_numbers=(((1,), (1,)), ((), ())),
        preferred_element_type=jnp.float32)                   # (Bb, C_in)
    att = att + b_sa_ref[...].astype(jnp.float32)             # + (1, C_in)

    # --- Fold the attention scale into the 1x1-conv weight:
    #     out[b,o,t] = sum_c (w_cv[o,c] * att[b,c]) * x[b,c,t] + b_cv[o]
    # w_eff is cast back to x's dtype so the big tile feeds the MXU natively
    # (bf16 in, f32 accumulate); for f32 inputs the cast is a no-op.
    w_eff = (w_cv_ref[...].astype(jnp.float32)[None, :, :]
             * att[:, None, :]).astype(x.dtype)               # (Bb, C_out, C_in)
    out = jnp.einsum("boc,bct->bot", w_eff, x,
                     preferred_element_type=jnp.float32)      # (Bb, C_out, Tp)
    out = out + b_cv_ref[...].astype(jnp.float32)[None, :, :]
    o_ref[...] = out.astype(o_ref.dtype)


def bhead_forward(x, w_sa, b_sa, w_cv, b_cv, *, block_bytes_target=8 << 20):
    """x: (B, C_in, T); w_sa: (C_in, C_in); b_sa: (C_in,);
    w_cv: (C_out, C_in); b_cv: (C_out,).  Returns (B, C_out, T)."""
    B, C_in, T = x.shape
    C_out = w_cv.shape[0]

    # --- lane / sublane friendly padding, done once in the wrapper ---
    Tp = _round_up(T, 128)
    Cin_p = _round_up(C_in, 8)
    Cout_p = _round_up(C_out, 8)

    # Fold the 1/T pooling scale into the SA conv weight (linear => free).
    w_sa_scaled = w_sa.astype(jnp.float32) * (1.0 / T)
    w_sa_p = jnp.pad(w_sa_scaled, ((0, Cin_p - C_in), (0, Cin_p - C_in)))
    b_sa_p = jnp.pad(b_sa.reshape(-1), (0, Cin_p - C_in)).reshape(1, Cin_p)
    w_cv_p = jnp.pad(w_cv, ((0, Cout_p - C_out), (0, Cin_p - C_in)))
    b_cv_p = jnp.pad(b_cv.reshape(-1), (0, Cout_p - C_out)).reshape(Cout_p, 1)

    # --- generation-aware VMEM budget + block-size selection ---
    vmem_phys, num_cores = _tpu_limits()
    # ~48 MiB on v7x (64 MiB physical), 96 MiB on v5e/v6e (128 MiB physical).
    vmem_limit = min((vmem_phys * 3) // 4, 96 << 20)

    itemsize = jnp.dtype(x.dtype).itemsize
    in_block_per_b = Cin_p * Tp * itemsize
    out_block_per_b = Cout_p * Tp * itemsize
    # Double-buffered in/out blocks + f32 temporaries (einsum accumulator etc.).
    per_b_vmem = 2 * (in_block_per_b + out_block_per_b) + (Cin_p + Cout_p) * Tp * 4
    weight_bytes = 2 * 4 * (Cin_p * Cin_p + Cout_p * Cin_p + Cin_p + Cout_p)
    vmem_budget = max(vmem_limit - weight_bytes - (4 << 20), per_b_vmem)

    bb_dma = max(1, block_bytes_target // max(in_block_per_b, 1))
    bb_vmem = max(1, vmem_budget // max(per_b_vmem, 1))
    # >=4 steps on 2-TC chips (v7x megacore sharding + pipelining), >=2 on
    # single-TC chips (DMA/compute overlap only).
    min_steps = 4 if num_cores >= 2 else 2
    bb = int(max(1, min(bb_dma, bb_vmem, B, pl.cdiv(B, min_steps))))

    # Ragged tail: pad the batch to a multiple of bb instead of shrinking bb
    # to an exact divisor.  Padded rows are zeros and are stripped below.
    grid_b = pl.cdiv(B, bb)
    B_pad = grid_b * bb

    pad_b = B_pad - B
    if pad_b or (Tp != T) or (Cin_p != C_in):
        x = jnp.pad(x, ((0, pad_b), (0, Cin_p - C_in), (0, Tp - T)))

    out_p = pl.pallas_call(
        bhead_kernel,
        out_shape=jax.ShapeDtypeStruct((B_pad, Cout_p, Tp), x.dtype),
        grid_spec=pltpu.PrefetchScalarGridSpec(
            num_scalar_prefetch=0,
            grid=(grid_b,),
            in_specs=[
                pl.BlockSpec((bb, Cin_p, Tp), lambda b: (b, 0, 0)),
                pl.BlockSpec((Cin_p, Cin_p), lambda b: (0, 0)),
                pl.BlockSpec((1, Cin_p), lambda b: (0, 0)),
                pl.BlockSpec((Cout_p, Cin_p), lambda b: (0, 0)),
                pl.BlockSpec((Cout_p, 1), lambda b: (0, 0)),
            ],
            out_specs=pl.BlockSpec((bb, Cout_p, Tp), lambda b: (b, 0, 0)),
        ),
        compiler_params=pltpu.CompilerParams(
            dimension_semantics=("parallel",),
            vmem_limit_bytes=int(vmem_limit),
        ),
    )(x, w_sa_p, b_sa_p, w_cv_p, b_cv_p)

    # Strip batch / channel / time padding.
    return out_p[:B, :C_out, :T]


def bhead_ref(x, w_sa, b_sa, w_cv, b_cv):
    # Pure-JAX reference (mirrors the PyTorch module semantics).
    avg = jnp.mean(x, axis=-1, keepdims=True)                       # (B, C_in, 1)
    att = jnp.einsum("oc,bcl->bol", w_sa, avg) + b_sa[None, :, None]
    xs = x * att                                                    # (B, C_in, T)
    return jnp.einsum("oc,bct->bot", w_cv, xs) + b_cv[None, :, None]


if __name__ == "__main__":
    # Small, deterministic shapes.  T=200 / C_in=4 / C_out=6 exercise the
    # lane (128), sublane (8), output-channel and ragged-batch padding paths.
    B, C_in, C_out, T = 2, 4, 6, 200
    key = jax.random.PRNGKey(0)
    kx, k1, k2, k3, k4 = jax.random.split(key, 5)

    x = jax.random.normal(kx, (B, C_in, T), dtype=jnp.float32)

    # PyTorch Conv1d-style uniform init bounds.
    bound = 1.0 / (C_in ** 0.5)
    w_sa = jax.random.uniform(k1, (C_in, C_in), jnp.float32, -bound, bound)
    b_sa = jax.random.uniform(k2, (C_in,), jnp.float32, -bound, bound)
    w_cv = jax.random.uniform(k3, (C_out, C_in), jnp.float32, -bound, bound)
    b_cv = jax.random.uniform(k4, (C_out,), jnp.float32, -bound, bound)

    out = jax.block_until_ready(bhead_forward(x, w_sa, b_sa, w_cv, b_cv))
    ref = bhead_ref(x, w_sa, b_sa, w_cv, b_cv)

    assert out.shape == (B, C_out, T)
    assert jnp.allclose(out, ref, atol=1e-5, rtol=1e-5), float(
        jnp.max(jnp.abs(out - ref)))
    print("KERNEL_OK")
</pallas_src>

<mosaic_0001>
module attributes {stable_mosaic.version = 11 : i64} {
  func.func @bhead_kernel(%arg0: i32, %arg1: memref<1x8x256xf32, #tpu.memory_space<vmem>>, %arg2: memref<8x8xf32, #tpu.memory_space<vmem>>, %arg3: memref<1x8xf32, #tpu.memory_space<vmem>>, %arg4: memref<8x8xf32, #tpu.memory_space<vmem>>, %arg5: memref<8x1xf32, #tpu.memory_space<vmem>>, %arg6: memref<1x8x256xf32, #tpu.memory_space<vmem>>) attributes {dimension_semantics = [#tpu.dimension_semantics<parallel>], iteration_bounds = array<i64: 2>, scalar_prefetch = 0 : i64, scratch_operands = 0 : i64, tpu.core_type = #tpu.core_type<tc>, window_params = [{transform_indices = @transform_0, window_bounds = array<i64: 1, 8, 256>}, {pipeline_mode = #tpu.pipeline_mode<synchronous>, transform_indices = @transform_1, window_bounds = array<i64: 8, 8>}, {pipeline_mode = #tpu.pipeline_mode<synchronous>, transform_indices = @transform_2, window_bounds = array<i64: 1, 8>}, {pipeline_mode = #tpu.pipeline_mode<synchronous>, transform_indices = @transform_3, window_bounds = array<i64: 8, 8>}, {pipeline_mode = #tpu.pipeline_mode<synchronous>, transform_indices = @transform_4, window_bounds = array<i64: 8, 1>}, {transform_indices = @transform_5, window_bounds = array<i64: 1, 8, 256>}]} {
    %c0 = arith.constant 0 : index
    %c0_0 = arith.constant 0 : index
    %c0_1 = arith.constant 0 : index
    %0 = vector.load %arg1[%c0, %c0_0, %c0_1] : memref<1x8x256xf32, #tpu.memory_space<vmem>>, vector<1x8x256xf32>
    %cst = arith.constant dense<0.000000e+00> : vector<1x8xf32>
    %1 = vector.multi_reduction <add>, %0, %cst [2] : vector<1x8x256xf32> to vector<1x8xf32>
    %c0_2 = arith.constant 0 : index
    %c0_3 = arith.constant 0 : index
    %2 = vector.load %arg2[%c0_2, %c0_3] : memref<8x8xf32, #tpu.memory_space<vmem>>, vector<8x8xf32>
    %cst_4 = arith.constant dense<0.000000e+00> : vector<1x8xf32>
    %3 = tpu.matmul %1, %2, %cst_4 {dimension_numbers = #tpu.dot_dimension_numbers<[1], [1], [0], [0], [0, 0, 1, 0], [], []>} : vector<1x8xf32>, vector<8x8xf32>, vector<1x8xf32> -> vector<1x8xf32>
    %c0_5 = arith.constant 0 : index
    %c0_6 = arith.constant 0 : index
    %4 = vector.load %arg3[%c0_5, %c0_6] : memref<1x8xf32, #tpu.memory_space<vmem>>, vector<1x8xf32>
    %5 = arith.addf %3, %4 : vector<1x8xf32>
    %c0_7 = arith.constant 0 : index
    %c0_8 = arith.constant 0 : index
    %6 = vector.load %arg4[%c0_7, %c0_8] : memref<8x8xf32, #tpu.memory_space<vmem>>, vector<8x8xf32>
    %7 = vector.shape_cast %6 : vector<8x8xf32> to vector<1x8x8xf32>
    %8 = vector.shape_cast %5 : vector<1x8xf32> to vector<1x1x8xf32>
    %9 = vector.broadcast %8 : vector<1x1x8xf32> to vector<1x8x8xf32>
    %10 = arith.mulf %7, %9 : vector<1x8x8xf32>
    "tpu.trace_start"() <{level = 10 : i32, message = "boc,bct->bot"}> : () -> ()
    %cst_9 = arith.constant dense<0.000000e+00> : vector<1x8x256xf32>
    %11 = tpu.matmul %10, %0, %cst_9 {dimension_numbers = #tpu.dot_dimension_numbers<[2], [1], [1], [2], [0, 0, 0, 1, 1, 2], [0], [0]>} : vector<1x8x8xf32>, vector<1x8x256xf32>, vector<1x8x256xf32> -> vector<1x8x256xf32>
    "tpu.trace_stop"() : () -> ()
    %c0_10 = arith.constant 0 : index
    %c0_11 = arith.constant 0 : index
    %12 = vector.load %arg5[%c0_10, %c0_11] : memref<8x1xf32, #tpu.memory_space<vmem>>, vector<8x1xf32>
    %13 = vector.shape_cast %12 : vector<8x1xf32> to vector<1x8x1xf32>
    %14 = vector.broadcast %13 : vector<1x8x1xf32> to vector<1x8x256xf32>
    %15 = arith.addf %11, %14 : vector<1x8x256xf32>
    %c0_12 = arith.constant 0 : index
    %c0_13 = arith.constant 0 : index
    %c0_14 = arith.constant 0 : index
    %16 = vector.load %arg6[%c0_12, %c0_13, %c0_14] : memref<1x8x256xf32, #tpu.memory_space<vmem>>, vector<1x8x256xf32>
    tpu.vector_store %arg6[%c0_12, %c0_13, %c0_14], %15 {strides = array<i32>} : memref<1x8x256xf32, #tpu.memory_space<vmem>>, vector<1x8x256xf32>,
    return
  }
  func.func @transform_0(%arg0: i32) -> (i32, i32, i32) {
    %c0_i32 = arith.constant 0 : i32
    %c0_i32_0 = arith.constant 0 : i32
    %c0_i32_1 = arith.constant 0 : i32
    return %arg0, %c0_i32, %c0_i32_0 : i32, i32, i32
  }
  func.func @transform_1(%arg0: i32) -> (i32, i32) {
    %c0_i32 = arith.constant 0 : i32
    %c0_i32_0 = arith.constant 0 : i32
    %c0_i32_1 = arith.constant 0 : i32
    return %c0_i32, %c0_i32_0 : i32, i32
  }
  func.func @transform_2(%arg0: i32) -> (i32, i32) {
    %c0_i32 = arith.constant 0 : i32
    %c0_i32_0 = arith.constant 0 : i32
    %c0_i32_1 = arith.constant 0 : i32
    return %c0_i32, %c0_i32_0 : i32, i32
  }
  func.func @transform_3(%arg0: i32) -> (i32, i32) {
    %c0_i32 = arith.constant 0 : i32
    %c0_i32_0 = arith.constant 0 : i32
    %c0_i32_1 = arith.constant 0 : i32
    return %c0_i32, %c0_i32_0 : i32, i32
  }
  func.func @transform_4(%arg0: i32) -> (i32, i32) {
    %c0_i32 = arith.constant 0 : i32
    %c0_i32_0 = arith.constant 0 : i32
    %c0_i32_1 = arith.constant 0 : i32
    return %c0_i32, %c0_i32_0 : i32, i32
  }
  func.func @transform_5(%arg0: i32) -> (i32, i32, i32) {
    %c0_i32 = arith.constant 0 : i32
    %c0_i32_0 = arith.constant 0 : i32
    %c0_i32_1 = arith.constant 0 : i32
    return %arg0, %c0_i32, %c0_i32_0 : i32, i32, i32
  }
}

</mosaic_0001>

<llo_original>
// kernel: tpu_custom_call.1
$region0: #{tpu_custom_call.1}
  #allocation0 [shape = 'u32[]', space=smem, size = 0x4, offset = 0x4, fixed_abs, tag = 'smem constant byte address 0x4 - core index']
  #allocation1 [shape = 'u32[72,128]{1,0:T(1,128)}', space=vmem, size = 0x9000, scoped, tag = 'internal scratch']
  %s0 = inlined_call_operand.hbm [shape: f32[2,8,256], index: 0, kind: input, shape index: {}]
  %s1 = inlined_call_operand.vmem [shape: f32[8,8], index: 1, kind: input, shape index: {}]
  %s2 = inlined_call_operand.vmem [shape: f32[1,8], index: 2, kind: input, shape index: {}]
  %s3 = inlined_call_operand.hbm [shape: f32[8,8], index: 3, kind: input, shape index: {}]
  %s4 = inlined_call_operand.vmem [shape: f32[8,1], index: 4, kind: input, shape index: {}]
  %s5 = inlined_call_operand.hbm [shape: f32[2,8,256], index: 5, kind: output, shape index: {}]
  %s6 = sld [smem:[#allocation0]]
  $region61: #{tpu_custom_call.1} parent=0
    _
  %s8 = ssub.s32 1, %s6
  %s9 = scalar_select 0, %s8, %s6
  $region1: #{tpu_custom_call.1} parent=0
    #allocation2 [shape = 'u8[16384]{0}', space=vmem, size = 0x4000, scoped, tag = 'input window, operand 0']
    #allocation3 [shape = 's32[2]{0}', space=sflag, size = 0x8, scoped, tag = 'scoped memory for tpu_custom_call.1']
    #allocation4 [shape = 's32[2]{0}', space=sflag, size = 0x8, scoped, tag = 'scoped memory for tpu_custom_call.1']
    #allocation5 [shape = 'u8[4096]{0}', space=vmem, size = 0x1000, scoped, tag = 'input window, operand 3, single buffered']
    #allocation6 [shape = 's32[1]{0}', space=sflag, size = 0x4, scoped, tag = 'scoped memory for tpu_custom_call.1']
    #allocation7 [shape = 'u8[16384]{0}', space=vmem, size = 0x4000, scoped, tag = 'output window, operand 0']
    %10 = vsyncpa [#allocation3], 0
    %s11 = scalar_lea.sflag [#allocation3], 1
    %12 = vsyncpa %s11, 0
    %13 = vsyncpa [#allocation6], 0
    %14 = vsyncpa [#allocation4], 0
    %s15 = scalar_lea.sflag [#allocation4], 1
    %16 = vsyncpa %s15, 0
    loop: start=0, step=1, limit=4
    $region2: #{tpu_custom_call.1} parent=1 // loop_pre_header
      _
    $region3: #{tpu_custom_call.1} parent=1 // loop_header
      %s18 = sphi 0, %s22
      %p19 = scmp.ge.s32.totalorder %s18, 4
      %s28 = sphi 0, %s30
      %s31 = sphi 0, %s28
      %s32 = sphi 0, %s31
      %s48 = sphi 0, %s32
      %s52 = sphi 0, %s52
      %s54 = sphi 0, %s52
      %s55 = sphi 0, %s54
      %s69 = sphi 0, %s55
      %s73 = sphi 0, %s73
      %s75 = sphi 0, %s73
      %s76 = sphi 0, %s75
      %s90 = sphi 0, %s76
      %s94 = sphi 0, %s94
      %s96 = sphi 0, %s94
      %s97 = sphi 0, %s96
      %s111 = sphi 0, %s97
      %s115 = sphi 0, %s115
      %s117 = sphi 0, %s115
      %s118 = sphi 0, %s117
      %s132 = sphi 0, %s118
      %s138 = sphi 0, %s140
      %s141 = sphi 0, %s138
      %s142 = sphi 0, %s141
      %s158 = sphi 0, %s142
    $region4: #{tpu_custom_call.1} parent=1 // loop_header_branch
      %21 = sbr.rel (%p19) target = $region8
    $region5: #{tpu_custom_call.1} parent=1 // loop_body
      %s23 = ssub.s32 %s18, 1
      %s24 = ssub.s32 %s18, 2
      %s25 = sadd.s32 %s18, 1
      %s26 = ssub.s32 %s18, %s25
      %p27 = scmp.eq.s32.totalorder %s26, 0
      %s29 = sadd.s32 %s28, 1
      %s30 = scalar_select %p27, %s28, %s29
      %p33 = pneg %p27
      %p34 = scmp.eq.s32.totalorder %s18, 1
      %p35 = por %p33, %p34
      %p36 = scmp.ne.s32.totalorder %s28, %s31
      %p37 = scmp.eq.s32.totalorder %s18, 0
      %p38 = por %p36, %p37
      %p39 = scmp.ne.s32.totalorder %s28, %s31
      %p40 = scmp.eq.s32.totalorder %s23, 1
      %p41 = por %p39, %p40
      %p42 = scmp.ne.s32.totalorder %s31, %s32
      %p43 = scmp.eq.s32.totalorder %s23, 0
      %p44 = por %p42, %p43
      %p45 = scmp.ne.s32.totalorder %s31, %s32
      %p46 = scmp.eq.s32.totalorder %s24, 1
      %p47 = por %p45, %p46
      %p49 = scmp.ne.s32.totalorder %s32, %s48
      %p50 = scmp.eq.s32.totalorder %s24, 0
      %p51 = por %p49, %p50
      %s53 = sadd.s32 %s52, 1
      %p56 = scmp.eq.s32.totalorder %s18, 1
      %p57 = scmp.ne.s32.totalorder %s52, %s54
      %p58 = scmp.eq.s32.totalorder %s18, 0
      %p59 = por %p57, %p58
      %p60 = scmp.ne.s32.totalorder %s52, %s54
      %p61 = scmp.eq.s32.totalorder %s23, 1
      %p62 = por %p60, %p61
      %p63 = scmp.ne.s32.totalorder %s54, %s55
      %p64 = scmp.eq.s32.totalorder %s23, 0
      %p65 = por %p63, %p64
      %p66 = scmp.ne.s32.totalorder %s54, %s55
      %p67 = scmp.eq.s32.totalorder %s24, 1
      %p68 = por %p66, %p67
      %p70 = scmp.ne.s32.totalorder %s55, %s69
      %p71 = scmp.eq.s32.totalorder %s24, 0
      %p72 = por %p70, %p71
      %s74 = sadd.s32 %s73, 1
      %p77 = scmp.eq.s32.totalorder %s18, 1
      %p78 = scmp.ne.s32.totalorder %s73, %s75
      %p79 = scmp.eq.s32.totalorder %s18, 0
      %p80 = por %p78, %p79
      %p81 = scmp.ne.s32.totalorder %s73, %s75
      %p82 = scmp.eq.s32.totalorder %s23, 1
      %p83 = por %p81, %p82
      %p84 = scmp.ne.s32.totalorder %s75, %s76
      %p85 = scmp.eq.s32.totalorder %s23, 0
      %p86 = por %p84, %p85
      %p87 = scmp.ne.s32.totalorder %s75, %s76
      %p88 = scmp.eq.s32.totalorder %s24, 1
      %p89 = por %p87, %p88
      %p91 = scmp.ne.s32.totalorder %s76, %s90
      %p92 = scmp.eq.s32.totalorder %s24, 0
      %p93 = por %p91, %p92
      %s95 = sadd.s32 %s94, 1
      %p98 = scmp.eq.s32.totalorder %s18, 1
      %p99 = scmp.ne.s32.totalorder %s94, %s96
      %p100 = scmp.eq.s32.totalorder %s18, 0
      %p101 = por %p99, %p100
      %p102 = scmp.ne.s32.totalorder %s94, %s96
      %p103 = scmp.eq.s32.totalorder %s23, 1
      %p104 = por %p102, %p103
      %p105 = scmp.ne.s32.totalorder %s96, %s97
      %p106 = scmp.eq.s32.totalorder %s23, 0
      %p107 = por %p105, %p106
      %p108 = scmp.ne.s32.totalorder %s96, %s97
      %p109 = scmp.eq.s32.totalorder %s24, 1
      %p110 = por %p108, %p109
      %p112 = scmp.ne.s32.totalorder %s97, %s111
      %p113 = scmp.eq.s32.totalorder %s24, 0
      %p114 = por %p112, %p113
      %s116 = sadd.s32 %s115, 1
      %p119 = scmp.eq.s32.totalorder %s18, 1
      %p120 = scmp.ne.s32.totalorder %s115, %s117
      %p121 = scmp.eq.s32.totalorder %s18, 0
      %p122 = por %p120, %p121
      %p123 = scmp.ne.s32.totalorder %s115, %s117
      %p124 = scmp.eq.s32.totalorder %s23, 1
      %p125 = por %p123, %p124
      %p126 = scmp.ne.s32.totalorder %s117, %s118
      %p127 = scmp.eq.s32.totalorder %s23, 0
      %p128 = por %p126, %p127
      %p129 = scmp.ne.s32.totalorder %s117, %s118
      %p130 = scmp.eq.s32.totalorder %s24, 1
      %p131 = por %p129, %p130
      %p133 = scmp.ne.s32.totalorder %s118, %s132
      %p134 = scmp.eq.s32.totalorder %s24, 0
      %p135 = por %p133, %p134
      %s136 = ssub.s32 %s18, %s25
      %p137 = scmp.eq.s32.totalorder %s136, 0
      %s139 = sadd.s32 %s138, 1
      %s140 = scalar_select %p137, %s138, %s139
      %p143 = pneg %p137
      %p144 = scmp.eq.s32.totalorder %s18, 1
      %p145 = por %p143, %p144
      %p146 = scmp.ne.s32.totalorder %s138, %s141
      %p147 = scmp.eq.s32.totalorder %s18, 0
      %p148 = por %p146, %p147
      %p149 = scmp.ne.s32.totalorder %s138, %s141
      %p150 = scmp.eq.s32.totalorder %s23, 1
      %p151 = por %p149, %p150
      %p152 = scmp.ne.s32.totalorder %s141, %s142
      %p153 = scmp.eq.s32.totalorder %s23, 0
      %p154 = por %p152, %p153
      %p155 = scmp.ne.s32.totalorder %s141, %s142
      %p156 = scmp.eq.s32.totalorder %s24, 1
      %p157 = por %p155, %p156
      %p159 = scmp.ne.s32.totalorder %s142, %s158
      %p160 = scmp.eq.s32.totalorder %s24, 0
      %p161 = por %p159, %p160
      %p162 = scmp.le.s32.totalorder 1, %s18
      %p163 = scmp.lt.s32.totalorder %s18, 3
      %p164 = pnand %p162, %p163
      %p165 = pneg %p164
      // Predicated region
      $region9: #{tpu_custom_call.1} parent=5 // pred_check
        _
      $region10: #{tpu_custom_call.1} parent=5 // pred_check_branch
        %167 = sbr.rel (%p164) target = $region12
      $region11: #{tpu_custom_call.1} parent=5 // pred_region
        %s168 = ssub.s32 %s18, 1
        // Predicated region
        $region13: #{tpu_custom_call.1} parent=11 // pred_check
          %p169 = pneg %p65
        $region14: #{tpu_custom_call.1} parent=11 // pred_check_branch
          %171 = sbr.rel (%p169) target = $region16
        $region15: #{tpu_custom_call.1} parent=11 // pred_region
          _
        $region16: #{tpu_custom_call.1} parent=11 // pred_fallthru
          _
        // Predicated region
        $region17: #{tpu_custom_call.1} parent=11 // pred_check
          %p172 = pneg %p86
        $region18: #{tpu_custom_call.1} parent=11 // pred_check_branch
          %174 = sbr.rel (%p172) target = $region20
        $region19: #{tpu_custom_call.1} parent=11 // pred_region
          _
        $region20: #{tpu_custom_call.1} parent=11 // pred_fallthru
          _
        // Predicated region
        $region21: #{tpu_custom_call.1} parent=11 // pred_check
          %p175 = pneg %p107
        $region22: #{tpu_custom_call.1} parent=11 // pred_check_branch
          %177 = sbr.rel (%p175) target = $region24
        $region23: #{tpu_custom_call.1} parent=11 // pred_region
          %179 = vsyncadd [#allocation6], 0
          %s181 = sshll.u32 %s3, 4
          %s182 = int_to_ptr.hbm [resolvable:$true] %s181
          %s183 = sshll.u32 [#allocation5], 4
          %s184 = int_to_ptr.vmem [resolvable:$true] %s183
          %186 = dma.hbm_to_vmem [thread:$0]  %s182, 128, %s184, [#allocation6]
        $region24: #{tpu_custom_call.1} parent=11 // pred_fallthru
          _
        // Predicated region
        $region25: #{tpu_custom_call.1} parent=11 // pred_check
          %p187 = pneg %p128
        $region26: #{tpu_custom_call.1} parent=11 // pred_check_branch
          %189 = sbr.rel (%p187) target = $region28
        $region27: #{tpu_custom_call.1} parent=11 // pred_region
          _
        $region28: #{tpu_custom_call.1} parent=11 // pred_fallthru
          _
      $region12: #{tpu_custom_call.1} parent=5 // pred_fallthru
        _
      %p190 = scmp.lt.s32.totalorder %s18, 2
      // Predicated region
      $region29: #{tpu_custom_call.1} parent=5 // pred_check
        %p191 = pneg %p190
      $region30: #{tpu_custom_call.1} parent=5 // pred_check_branch
        %193 = sbr.rel (%p191) target = $region32
      $region31: #{tpu_custom_call.1} parent=5 // pred_region
        // Predicated region
        $region33: #{tpu_custom_call.1} parent=31 // pred_check
          %p194 = pneg %p38
        $region34: #{tpu_custom_call.1} parent=31 // pred_check_branch
          %196 = sbr.rel (%p194) target = $region36
        $region35: #{tpu_custom_call.1} parent=31 // pred_region
          %s197 = sand.u32 %s28, 1
          %s198 = scalar_lea.sflag [#allocation3], %s197
          %s199 = sand.u32 %s28, 1
          %s200 = smul.addr %s199, 16
          %s201 = scalar_lea.vmem [#allocation2], %s200
          %203 = vsyncadd %s198, 0
          %s204 = smul.addr %s18, 2
          %s205 = smul.addr %s204, 8
          %s206 = scalar_lea.hbm %s0, %s205
          %s208 = sshll.u32 %s206, 4
          %s209 = int_to_ptr.hbm [resolvable:$true] %s208
          %s210 = sshll.u32 %s201, 4
          %s211 = int_to_ptr.vmem [resolvable:$true] %s210
          %213 = dma.hbm_to_vmem [thread:$0]  %s209, 256, %s211, %s198
        $region36: #{tpu_custom_call.1} parent=31 // pred_fallthru
          _
      $region32: #{tpu_custom_call.1} parent=5 // pred_fallthru
        _
      %p214 = scmp.le.s32.totalorder 1, %s18
      %p215 = scmp.lt.s32.totalorder %s18, 3
      %p216 = pnand %p214, %p215
      %p217 = pneg %p216
      // Predicated region
      $region37: #{tpu_custom_call.1} parent=5 // pred_check
        _
      $region38: #{tpu_custom_call.1} parent=5 // pred_check_branch
        %219 = sbr.rel (%p216) target = $region40
      $region39: #{tpu_custom_call.1} parent=5 // pred_region
        %s220 = ssub.s32 %s18, 1
        %s221 = sand.u32 %s31, 1
        %s222 = scalar_lea.sflag [#allocation3], %s221
        %s223 = sand.u32 %s31, 1
        %s224 = smul.addr %s223, 16
        %s225 = scalar_lea.vmem [#allocation2], %s224
        // Predicated region
        $region41: #{tpu_custom_call.1} parent=39 // pred_check
          %p226 = pneg %p44
        $region42: #{tpu_custom_call.1} parent=39 // pred_check_branch
          %228 = sbr.rel (%p226) target = $region44
        $region43: #{tpu_custom_call.1} parent=39 // pred_region
          %230 = dma.done %s222, 256
        $region44: #{tpu_custom_call.1} parent=39 // pred_fallthru
          _
        // Predicated region
        $region45: #{tpu_custom_call.1} parent=39 // pred_check
          %p231 = pneg %p107
        $region46: #{tpu_custom_call.1} parent=39 // pred_check_branch
          %233 = sbr.rel (%p231) target = $region48
        $region47: #{tpu_custom_call.1} parent=39 // pred_region
          %235 = dma.done [#allocation6], 128
        $region48: #{tpu_custom_call.1} parent=39 // pred_fallthru
          _
        %s236 = sand.u32 %s31, 1
        %s237 = scalar_lea.sflag [#allocation3], %s236
        %s238 = sand.u32 %s31, 1
        %s239 = smul.addr %s238, 16
        %s240 = scalar_lea.vmem [#allocation2], %s239
        %p241 = pneg %p44
        %p242 = pneg %p41
        %p243 = pneg %p65
        %p244 = pneg %p62
        %p245 = pneg %p86
        %p246 = pneg %p83
        %p247 = pneg %p107
        %p248 = pneg %p104
        %p249 = pneg %p128
        %p250 = pneg %p125
        %p251 = pneg %p154
        %p252 = pneg %p151
        %s253 = sand.u32 %s141, 1
        %s254 = scalar_lea.sflag [#allocation4], %s253
        %s255 = sand.u32 %s141, 1
        %s256 = smul.addr %s255, 16
        %s257 = scalar_lea.vmem [#allocation7], %s256
        %v258 = vld [vmem:[%s225] sm:$0xff]
        %v259 = vld [vmem:[%s225 + $0x8] sm:$0xff]
        %v260 = vadd.f32 %v258, %v259
        %261 = vadd.xlane.f32.xlu0 %v260
        %v262 = vpop.xlane.xlu0 %261
        %v263 = vld [vmem:[%s1] sm:$0xff]
        %v264 = vld [vmem:[%s2] sm:$0x1]
        %v266 = vlaneseq
        %v267 = vand.u32 %v266, 127
        %v268 = vperm.slane %v262, %v267
        %vm269 = vcmask 64512
        %v270 = vsel %vm269, %v268, 0
        %v273 = vsel %vm269, %v263, 0
        %275 = vmatpush.xpose.msra.mxu0 0.0
        %276 = vmatpush.xpose.msra.mxu0 0.0
        %277 = vmatpush.xpose.msra.mxu0 0.0
        %278 = vmatpush.xpose.msra.mxu0 0.0
        %279 = vmatpush.xpose.msra.mxu0 0.0
        %280 = vmatpush.xpose.msra.mxu0 0.0
        %281 = vmatpush.xpose.msra.mxu0 0.0
        %282 = vmatpush.xpose.msra.mxu0 0.0
        %283 = vmatpush.xpose.msra.mxu0 0.0
        %284 = vmatpush.xpose.msra.mxu0 0.0
        %285 = vmatpush.xpose.msra.mxu0 0.0
        %286 = vmatpush.xpose.msra.mxu0 0.0
        %287 = vmatpush.xpose.msra.mxu0 0.0
        %288 = vmatpush.xpose.msra.mxu0 0.0
        %289 = vmatpush.xpose.msra.mxu0 0.0
        %290 = vmatpush.xpose.msra.mxu0 %v273
        %291 = vmatmul.f32.gmra.mxu0 %v270
        %v292 = vpop.f32.mrf.mxu0
        %v293 = vadd.f32 %v264, %v292
        %294 = vdwg.mxu0
        %v295 = vld [vmem:[#allocation5] sm:$0xff]
        %v296 = vperm.slane %v293, 0
        %v297 = vmul.f32 %v295, %v296
        %v298 = vld [vmem:[%s4] sm:$0xff]
        %300 = vset.pattern.permute.xlu0 0
        %301 = vperm.xlu0 %300, %v298
        %v302 = vpop.permute.xlu0 %301
        %v305 = vsel %vm269, %v297, 0
        %307 = vmatpush.msra.mxu0 0.0
        %308 = vmatpush.msra.mxu0 0.0
        %309 = vmatpush.msra.mxu0 0.0
        %310 = vmatpush.msra.mxu0 0.0
        %311 = vmatpush.msra.mxu0 0.0
        %312 = vmatpush.msra.mxu0 0.0
        %313 = vmatpush.msra.mxu0 0.0
        %314 = vmatpush.msra.mxu0 0.0
        %315 = vmatpush.msra.mxu0 0.0
        %316 = vmatpush.msra.mxu0 0.0
        %317 = vmatpush.msra.mxu0 0.0
        %318 = vmatpush.msra.mxu0 0.0
        %319 = vmatpush.msra.mxu0 0.0
        %320 = vmatpush.msra.mxu0 0.0
        %321 = vmatpush.msra.mxu0 0.0
        %322 = vmatpush.msra.mxu0 %v258
        %323 = vmatmul.f32.gmra.mxu0 %v305
        %v324 = vpop.f32.mrf.mxu0
        %v325 = vadd.f32 %v302, %v324
        %326 = vdwg.mxu0
        %327 = vmatpush.msra.mxu0 0.0
        %328 = vmatpush.msra.mxu0 0.0
        %329 = vmatpush.msra.mxu0 0.0
        %330 = vmatpush.msra.mxu0 0.0
        %331 = vmatpush.msra.mxu0 0.0
        %332 = vmatpush.msra.mxu0 0.0
        %333 = vmatpush.msra.mxu0 0.0
        %334 = vmatpush.msra.mxu0 0.0
        %335 = vmatpush.msra.mxu0 0.0
        %336 = vmatpush.msra.mxu0 0.0
        %337 = vmatpush.msra.mxu0 0.0
        %338 = vmatpush.msra.mxu0 0.0
        %339 = vmatpush.msra.mxu0 0.0
        %340 = vmatpush.msra.mxu0 0.0
        %341 = vmatpush.msra.mxu0 0.0
        %342 = vmatpush.msra.mxu0 %v259
        %343 = vmatmul.f32.gmra.mxu0 %v305
        %v344 = vpop.f32.mrf.mxu0
        %v345 = vadd.f32 %v302, %v344
        %346 = vdwg.mxu0
        %347 = vst [vmem:[%s257] sm:$0xff] %v325
        %348 = vst [vmem:[%s257 + $0x8] sm:$0xff] %v345
        %s349 = sand.u32 %s141, 1
        %s350 = scalar_lea.sflag [#allocation4], %s349
        %s351 = sand.u32 %s141, 1
        %s352 = smul.addr %s351, 16
        %s353 = scalar_lea.vmem [#allocation7], %s352
        // Predicated region
        $region49: #{tpu_custom_call.1} parent=39 // pred_check
          %p354 = pneg %p151
        $region50: #{tpu_custom_call.1} parent=39 // pred_check_branch
          %356 = sbr.rel (%p354) target = $region52
        $region51: #{tpu_custom_call.1} parent=39 // pred_region
          %358 = vsyncadd %s350, 0
          %s359 = smul.addr %s23, 2
          %s360 = smul.addr %s359, 8
          %s361 = scalar_lea.hbm %s5, %s360
          %s363 = sshll.u32 %s353, 4
          %s364 = int_to_ptr.vmem [resolvable:$true] %s363
          %s365 = sshll.u32 %s361, 4
          %s366 = int_to_ptr.hbm [resolvable:$true] %s365
          %368 = dma.vmem_to_hbm [thread:$0]  %s364, 256, %s366, %s350
        $region52: #{tpu_custom_call.1} parent=39 // pred_fallthru
          _
      $region40: #{tpu_custom_call.1} parent=5 // pred_fallthru
        _
      %p369 = scmp.le.s32.totalorder 2, %s18
      // Predicated region
      $region53: #{tpu_custom_call.1} parent=5 // pred_check
        %p370 = pneg %p369
      $region54: #{tpu_custom_call.1} parent=5 // pred_check_branch
        %372 = sbr.rel (%p370) target = $region56
      $region55: #{tpu_custom_call.1} parent=5 // pred_region
        %s373 = ssub.s32 %s18, 2
        // Predicated region
        $region57: #{tpu_custom_call.1} parent=55 // pred_check
          %p374 = pneg %p157
        $region58: #{tpu_custom_call.1} parent=55 // pred_check_branch
          %376 = sbr.rel (%p374) target = $region60
        $region59: #{tpu_custom_call.1} parent=55 // pred_region
          %s377 = sand.u32 %s142, 1
          %s378 = scalar_lea.sflag [#allocation4], %s377
          %s379 = sand.u32 %s142, 1
          %s380 = smul.addr %s379, 16
          %s381 = scalar_lea.vmem [#allocation7], %s380
          %383 = dma.done %s378, 256
        $region60: #{tpu_custom_call.1} parent=55 // pred_fallthru
          _
      $region56: #{tpu_custom_call.1} parent=5 // pred_fallthru
        _
    $region6: #{tpu_custom_call.1} parent=1 // loop_footer
      %s22 = sadd.s32 1, %s18
    $region7: #{tpu_custom_call.1} parent=1 // loop_footer_branch
      %17 = sbr.rel target = $region3
    $region8: #{tpu_custom_call.1} parent=1 // loop_exit
      _
    %384 = vsyncpa [#allocation3], 1
    %s385 = scalar_lea.sflag [#allocation3], 1
    %386 = vsyncpa %s385, 1
    %387 = vsyncpa [#allocation6], 1
    %388 = vsyncpa [#allocation4], 1
    %s389 = scalar_lea.sflag [#allocation4], 1
    %390 = vsyncpa %s389, 1

</llo_original>
